<compile_context>
chip_gen: v7x
topology: tpu7x:2x2x1
jax: 0.10.0
libtpu: 0.0.40
codegen_flags: <defaults>
</compile_context>

<pallas_src>
import jax
import jax.numpy as jnp
from jax.experimental import pallas as pl
from jax.experimental.pallas import tpu as pltpu

# ---- sizes (small, consistent with a toy GAN) ------------------------------
BATCH = 8                      # batch of latent codes
LATENT = 32                    # latent dim
GH = 64                        # generator hidden
IMG_C, IMG_H, IMG_W = 1, 16, 16
IMG = IMG_C * IMG_H * IMG_W    # 256, generator output / discriminator input
DH = 64                        # discriminator hidden

# ---- single packed bf16 parameter slab, lane width 256 (== IMG) -------------
# All row offsets are multiples of 16 so every static slice is aligned to the
# bf16 (16, 128) native tile (no relayout copies); all slices start at lane 0.
_R_GW2 = 0      # gw2  (GH, IMG)      rows   0:64,   lanes 0:256
_R_GB2 = 64     # gb2  (1, IMG)       row    64
_R_GW1 = 80     # gw1  (LATENT, GH)   rows  80:112,  lanes 0:64
_R_GB1 = 112    # gb1  (1, GH)        row   112,     lanes 0:64
_R_DW1 = 128    # dw1  (IMG, DH)      rows 128:384,  lanes 0:64
_R_DB1 = 384    # db1  (1, DH)        row   384,     lanes 0:64
_R_DW2T = 400   # dw2^T (1, DH)       row   400,     lanes 0:64
_R_DB2 = 416    # db2 scalar          row   416,     lane 0
_W_ROWS, _W_COLS = 432, IMG


def _gan_kernel(z_ref, w_ref, o_ref):
    zb = z_ref[...].astype(jnp.bfloat16)                            # (TB, LATENT)
    # ---- generator ----
    h = jnp.dot(zb, w_ref[_R_GW1:_R_GW1 + LATENT, :GH],
                preferred_element_type=jnp.float32)                 # (TB, GH) f32
    h = jnp.maximum(h + w_ref[_R_GB1:_R_GB1 + 1, :GH].astype(jnp.float32), 0.0)
    img = jnp.dot(h.astype(jnp.bfloat16), w_ref[_R_GW2:_R_GW2 + GH, :],
                  preferred_element_type=jnp.float32)               # (TB, IMG) f32
    img = jnp.tanh(img + w_ref[_R_GB2:_R_GB2 + 1, :].astype(jnp.float32))
    # ---- discriminator ----
    d = jnp.dot(img.astype(jnp.bfloat16), w_ref[_R_DW1:_R_DW1 + IMG, :DH],
                preferred_element_type=jnp.float32)                 # (TB, DH) f32
    d = d + w_ref[_R_DB1:_R_DB1 + 1, :DH].astype(jnp.float32)
    d = jnp.maximum(d, 0.2 * d)                                     # LeakyReLU(0.2)
    # final N=1 layer: lane reduction on the XLU (no MXU push for N=1)
    w_last = w_ref[_R_DW2T:_R_DW2T + 1, :DH].astype(jnp.float32)    # (1, DH)
    logit = jnp.sum(d * w_last, axis=-1, keepdims=True)             # (TB, 1)
    db2 = w_ref[_R_DB2:_R_DB2 + 1, 0:1].astype(jnp.float32)         # (1, 1)
    o_ref[...] = logit + db2


@jax.jit
def independent_latent_potential(z, w_packed):
    """out = discriminator(generator(z)); returns (B, 1) f32 logits."""
    B = z.shape[0]
    tb = B if B <= 128 else 128               # batch tile per grid step
    assert B % tb == 0, "batch must be a multiple of the batch tile"
    cost = pl.CostEstimate(
        flops=2 * B * (LATENT * GH + GH * IMG + IMG * DH + DH),
        transcendentals=B * IMG,
        bytes_accessed=4 * B * LATENT + 2 * _W_ROWS * _W_COLS + 4 * B,
    )
    return pl.pallas_call(
        _gan_kernel,
        out_shape=jax.ShapeDtypeStruct((B, 1), jnp.float32),
        grid=(B // tb,),
        in_specs=[
            pl.BlockSpec((tb, LATENT), lambda i: (i, 0)),
            pl.BlockSpec((_W_ROWS, _W_COLS), lambda i: (0, 0)),
        ],
        out_specs=pl.BlockSpec((tb, 1), lambda i: (i, 0)),
        compiler_params=pltpu.CompilerParams(dimension_semantics=("parallel",)),
        cost_estimate=cost,
    )(z, w_packed)


def init_params(key):
    """Deterministic PyTorch-Linear-style init: U(-1/sqrt(fan_in), +1/sqrt(fan_in))."""
    ks = jax.random.split(key, 8)

    def lin(kw, kb, fan_in, fan_out):
        bound = 1.0 / jnp.sqrt(jnp.float32(fan_in))
        w = jax.random.uniform(kw, (fan_in, fan_out), jnp.float32, -bound, bound)
        b = jax.random.uniform(kb, (1, fan_out), jnp.float32, -bound, bound)
        return w, b

    gw1, gb1 = lin(ks[0], ks[1], LATENT, GH)
    gw2, gb2 = lin(ks[2], ks[3], GH, IMG)
    dw1, db1 = lin(ks[4], ks[5], IMG, DH)
    dw2, db2 = lin(ks[6], ks[7], DH, 1)
    return (gw1, gb1, gw2, gb2, dw1, db1, dw2, db2)


def pack_params(params):
    """One-time (init-time) packing of the 8 params into one bf16 VMEM slab."""
    (gw1, gb1, gw2, gb2, dw1, db1, dw2, db2) = params
    w = jnp.zeros((_W_ROWS, _W_COLS), jnp.float32)
    w = w.at[_R_GW2:_R_GW2 + GH, :].set(gw2)
    w = w.at[_R_GB2, :].set(gb2[0])
    w = w.at[_R_GW1:_R_GW1 + LATENT, :GH].set(gw1)
    w = w.at[_R_GB1, :GH].set(gb1[0])
    w = w.at[_R_DW1:_R_DW1 + IMG, :DH].set(dw1)
    w = w.at[_R_DB1, :DH].set(db1[0])
    w = w.at[_R_DW2T, :DH].set(dw2[:, 0])
    w = w.at[_R_DB2, 0].set(db2[0, 0])
    return w.astype(jnp.bfloat16)


def _reference(z, params):
    """Pure-JAX reference: same forward pass with bf16-rounded matmul operands,
    f32 accumulation and f32 elementwise math (matches the kernel's numerics)."""
    (gw1, gb1, gw2, gb2, dw1, db1, dw2, db2) = params
    c = lambda x: x.astype(jnp.bfloat16).astype(jnp.float32)
    h = jnp.maximum(c(z) @ c(gw1) + c(gb1), 0.0)
    img = jnp.tanh(c(h) @ c(gw2) + c(gb2))
    d = c(img) @ c(dw1) + c(db1)
    d = jnp.maximum(d, 0.2 * d)
    return jnp.sum(d * c(dw2).T, axis=-1, keepdims=True) + c(db2)


if __name__ == "__main__":
    key = jax.random.PRNGKey(0)
    kz, kp = jax.random.split(key)
    z = jax.random.normal(kz, (BATCH, LATENT), jnp.float32)
    params = init_params(kp)
    w_packed = pack_params(params)        # packed once, reused every call

    out = independent_latent_potential(z, w_packed)
    out = jax.block_until_ready(out)

    ref = _reference(z, params)
    assert out.shape == (BATCH, 1)
    assert jnp.allclose(out, ref, atol=1e-2, rtol=1e-2)
    print("KERNEL_OK")
</pallas_src>

<mosaic_0001>
module attributes {stable_mosaic.version = 11 : i64} {
  func.func @_gan_kernel(%arg0: i32, %arg1: memref<8x32xf32, #tpu.memory_space<vmem>>, %arg2: memref<432x256xbf16, #tpu.memory_space<vmem>>, %arg3: memref<8x1xf32, #tpu.memory_space<vmem>>) attributes {dimension_semantics = [#tpu.dimension_semantics<parallel>], iteration_bounds = array<i64: 1>, scalar_prefetch = 0 : i64, scratch_operands = 0 : i64, tpu.core_type = #tpu.core_type<tc>, window_params = [{transform_indices = @transform_0, window_bounds = array<i64: 8, 32>}, {pipeline_mode = #tpu.pipeline_mode<synchronous>, transform_indices = @transform_1, window_bounds = array<i64: 432, 256>}, {transform_indices = @transform_2, window_bounds = array<i64: 8, 1>}]} {
    %c0 = arith.constant 0 : index
    %c0_0 = arith.constant 0 : index
    %0 = vector.load %arg1[%c0, %c0_0] : memref<8x32xf32, #tpu.memory_space<vmem>>, vector<8x32xf32>
    %1 = arith.truncf %0 : vector<8x32xf32> to vector<8x32xbf16>
    %c80 = arith.constant 80 : index
    %c0_1 = arith.constant 0 : index
    %2 = vector.load %arg2[%c80, %c0_1] : memref<432x256xbf16, #tpu.memory_space<vmem>>, vector<32x64xbf16>
    %cst = arith.constant dense<0.000000e+00> : vector<8x64xf32>
    %3 = tpu.matmul %1, %2, %cst {dimension_numbers = #tpu.dot_dimension_numbers<[1], [0], [0], [1], [0, 0, 1, 1], [], []>} : vector<8x32xbf16>, vector<32x64xbf16>, vector<8x64xf32> -> vector<8x64xf32>
    %c112 = arith.constant 112 : index
    %c0_2 = arith.constant 0 : index
    %4 = vector.load %arg2[%c112, %c0_2] : memref<432x256xbf16, #tpu.memory_space<vmem>>, vector<1x64xbf16>
    %5 = arith.extf %4 : vector<1x64xbf16> to vector<1x64xf32>
    %6 = vector.broadcast %5 : vector<1x64xf32> to vector<8x64xf32>
    %7 = arith.addf %3, %6 : vector<8x64xf32>
    %cst_3 = arith.constant 0.000000e+00 : f32
    %8 = vector.broadcast %cst_3 : f32 to vector<8x64xf32>
    %9 = arith.maximumf %7, %8 : vector<8x64xf32>
    %10 = arith.truncf %9 : vector<8x64xf32> to vector<8x64xbf16>
    %c0_4 = arith.constant 0 : index
    %c0_5 = arith.constant 0 : index
    %11 = vector.load %arg2[%c0_4, %c0_5] : memref<432x256xbf16, #tpu.memory_space<vmem>>, vector<64x256xbf16>
    %cst_6 = arith.constant dense<0.000000e+00> : vector<8x256xf32>
    %12 = tpu.matmul %10, %11, %cst_6 {dimension_numbers = #tpu.dot_dimension_numbers<[1], [0], [0], [1], [0, 0, 1, 1], [], []>} : vector<8x64xbf16>, vector<64x256xbf16>, vector<8x256xf32> -> vector<8x256xf32>
    %c64 = arith.constant 64 : index
    %c0_7 = arith.constant 0 : index
    %13 = vector.load %arg2[%c64, %c0_7] : memref<432x256xbf16, #tpu.memory_space<vmem>>, vector<1x256xbf16>
    %14 = arith.extf %13 : vector<1x256xbf16> to vector<1x256xf32>
    %15 = vector.broadcast %14 : vector<1x256xf32> to vector<8x256xf32>
    %16 = arith.addf %12, %15 : vector<8x256xf32>
    %17 = math.tanh %16 : vector<8x256xf32>
    %18 = arith.truncf %17 : vector<8x256xf32> to vector<8x256xbf16>
    %c128 = arith.constant 128 : index
    %c0_8 = arith.constant 0 : index
    %19 = vector.load %arg2[%c128, %c0_8] : memref<432x256xbf16, #tpu.memory_space<vmem>>, vector<256x64xbf16>
    %cst_9 = arith.constant dense<0.000000e+00> : vector<8x64xf32>
    %20 = tpu.matmul %18, %19, %cst_9 {dimension_numbers = #tpu.dot_dimension_numbers<[1], [0], [0], [1], [0, 0, 1, 1], [], []>} : vector<8x256xbf16>, vector<256x64xbf16>, vector<8x64xf32> -> vector<8x64xf32>
    %c384 = arith.constant 384 : index
    %c0_10 = arith.constant 0 : index
    %21 = vector.load %arg2[%c384, %c0_10] : memref<432x256xbf16, #tpu.memory_space<vmem>>, vector<1x64xbf16>
    %22 = arith.extf %21 : vector<1x64xbf16> to vector<1x64xf32>
    %23 = vector.broadcast %22 : vector<1x64xf32> to vector<8x64xf32>
    %24 = arith.addf %20, %23 : vector<8x64xf32>
    %cst_11 = arith.constant 2.000000e-01 : f32
    %25 = vector.broadcast %cst_11 : f32 to vector<8x64xf32>
    %26 = arith.mulf %25, %24 : vector<8x64xf32>
    %27 = arith.maximumf %24, %26 : vector<8x64xf32>
    %c400 = arith.constant 400 : index
    %c0_12 = arith.constant 0 : index
    %28 = vector.load %arg2[%c400, %c0_12] : memref<432x256xbf16, #tpu.memory_space<vmem>>, vector<1x64xbf16>
    %29 = arith.extf %28 : vector<1x64xbf16> to vector<1x64xf32>
    %30 = vector.broadcast %29 : vector<1x64xf32> to vector<8x64xf32>
    %31 = arith.mulf %27, %30 : vector<8x64xf32>
    %cst_13 = arith.constant dense<0.000000e+00> : vector<8xf32>
    %32 = vector.multi_reduction <add>, %31, %cst_13 [1] : vector<8x64xf32> to vector<8xf32>
    %33 = vector.shape_cast %32 : vector<8xf32> to vector<8x1xf32>
    %c416 = arith.constant 416 : index
    %c0_14 = arith.constant 0 : index
    %34 = vector.load %arg2[%c416, %c0_14] : memref<432x256xbf16, #tpu.memory_space<vmem>>, vector<1x1xbf16>
    %35 = arith.extf %34 : vector<1x1xbf16> to vector<1x1xf32>
    %36 = vector.broadcast %35 : vector<1x1xf32> to vector<8x1xf32>
    %37 = arith.addf %33, %36 : vector<8x1xf32>
    %c0_15 = arith.constant 0 : index
    %c0_16 = arith.constant 0 : index
    %38 = vector.load %arg3[%c0_15, %c0_16] : memref<8x1xf32, #tpu.memory_space<vmem>>, vector<8x1xf32>
    tpu.vector_store %arg3[%c0_15, %c0_16], %37 {strides = array<i32>} : memref<8x1xf32, #tpu.memory_space<vmem>>, vector<8x1xf32>,
    return
  }
  func.func @transform_0(%arg0: i32) -> (i32, i32) {
    %c0_i32 = arith.constant 0 : i32
    %c0_i32_0 = arith.constant 0 : i32
    return %arg0, %c0_i32 : i32, i32
  }
  func.func @transform_1(%arg0: i32) -> (i32, i32) {
    %c0_i32 = arith.constant 0 : i32
    %c0_i32_0 = arith.constant 0 : i32
    %c0_i32_1 = arith.constant 0 : i32
    return %c0_i32, %c0_i32_0 : i32, i32
  }
  func.func @transform_2(%arg0: i32) -> (i32, i32) {
    %c0_i32 = arith.constant 0 : i32
    %c0_i32_0 = arith.constant 0 : i32
    return %arg0, %c0_i32 : i32, i32
  }
}

</mosaic_0001>

<llo_original>
// kernel: independent_latent_potential.1
$region0: #{independent_latent_potential.1}
  #allocation0 [shape = 'u32[]', space=smem, size = 0x4, offset = 0x4, fixed_abs, tag = 'smem constant byte address 0x4 - core index']
  #allocation1 [shape = 'u32[144,128]{1,0:T(1,128)}', space=vmem, size = 0x12000, scoped, tag = 'internal scratch']
  %s0 = inlined_call_operand.hbm [shape: f32[8,32], index: 0, kind: input, shape index: {}]
  %s1 = inlined_call_operand.hbm [shape: bf16[432,256], index: 1, kind: input, shape index: {}]
  %s2 = inlined_call_operand.vmem [shape: f32[8,1], index: 2, kind: output, shape index: {}]
  %s3 = sld [smem:[#allocation0]]
  $region26: #{independent_latent_potential.1} parent=0
    _
  %s5 = ssub.s32 1, %s3
  %s6 = scalar_select 0, %s5, %s3
  $region1: #{independent_latent_potential.1} parent=0
    #allocation2 [shape = 'u8[4096]{0}', space=vmem, size = 0x1000, scoped, tag = 'input window, operand 0, single buffered']
    #allocation3 [shape = 's32[1]{0}', space=sflag, size = 0x4, scoped, tag = 'scoped memory for independent_latent_potential.1']
    #allocation4 [shape = 'u8[221184]{0}', space=vmem, size = 0x36000, scoped, tag = 'input window, operand 1, single buffered']
    #allocation5 [shape = 's32[1]{0}', space=sflag, size = 0x4, scoped, tag = 'scoped memory for independent_latent_potential.1']
    %7 = vsyncpa [#allocation3], 0
    %8 = vsyncpa [#allocation5], 0
    // Predicated region
    $region2: #{independent_latent_potential.1} parent=1 // pred_check
      _
    $region3: #{independent_latent_potential.1} parent=1 // pred_check_branch
      %10 = sbr.rel (0) target = $region5
    $region4: #{independent_latent_potential.1} parent=1 // pred_region
      %s12 = ssub.s32 128, 128
      %13 = vsyncadd [#allocation3], %s12
      %s15 = sshll.u32 [#allocation2], 4
      %s16 = int_to_ptr.vmem [resolvable:$true] %s15
      %18 = dma.hbm_to_vmem [thread:$0]  %s0, 128, %s16, [#allocation3]
    $region5: #{independent_latent_potential.1} parent=1 // pred_fallthru
      _
    // Predicated region
    $region6: #{independent_latent_potential.1} parent=1 // pred_check
      _
    $region7: #{independent_latent_potential.1} parent=1 // pred_check_branch
      %20 = sbr.rel (0) target = $region9
    $region8: #{independent_latent_potential.1} parent=1 // pred_region
      %s22 = ssub.s32 6912, 6912
      %23 = vsyncadd [#allocation5], %s22
      %s24 = sshll.u32 [#allocation4], 4
      %s25 = int_to_ptr.vmem [resolvable:$true] %s24
      %30 = dma.hbm_to_vmem [thread:$0]  %s1, 6912, %s25, [#allocation5], 128, 128, 8
    $region9: #{independent_latent_potential.1} parent=1 // pred_fallthru
      _
    // Predicated region
    $region10: #{independent_latent_potential.1} parent=1 // pred_check
      _
    $region11: #{independent_latent_potential.1} parent=1 // pred_check_branch
      %32 = sbr.rel (0) target = $region13
    $region12: #{independent_latent_potential.1} parent=1 // pred_region
      %33 = dma.done [#allocation3], 128
    $region13: #{independent_latent_potential.1} parent=1 // pred_fallthru
      _
    // Predicated region
    $region14: #{independent_latent_potential.1} parent=1 // pred_check
      _
    $region15: #{independent_latent_potential.1} parent=1 // pred_check_branch
      %35 = sbr.rel (0) target = $region17
    $region16: #{independent_latent_potential.1} parent=1 // pred_region
      %36 = dma.done [#allocation5], 6912
    $region17: #{independent_latent_potential.1} parent=1 // pred_fallthru
      _
    %v38 = vld [vmem:[#allocation2] sm:$0xff]
    %v39 = vpack.c.bf16 %v38, %v38
    %v40 = vld [vmem:[#allocation4 + $0x50] sm:$0xf]
    %v41 = vld [vmem:[#allocation4 + $0x58] sm:$0xf]
    %v42 = vld [vmem:[#allocation4 + $0x60] sm:$0xf]
    %v43 = vld [vmem:[#allocation4 + $0x68] sm:$0xf]
    %v44 = vld [vmem:[#allocation4 + $0x70] sm:$0x1]
    %v45 = vunpack.c.l.bf16 %v44
    %v46 = vlaneseq
    %v47 = vshrl.u32 %v46, 7
    %v48 = vsub.s32 0, %v47
    %v49 = vrot.slane %v45, %v48
    %v54 = vunpack.c.l.b16 %v40
    %v55 = vunpack.c.l.b16 %v41
    %v56 = vunpack.c.l.b16 %v42
    %v57 = vunpack.c.l.b16 %v43
    %v58 = vpack.c.b16 %v55, %v54
    %v59 = vpack.c.b16 %v57, %v56
    %vm62 = vcmask 261120
    %v64 = vsel %vm62, %v39, 0
    %66 = vmatprep.subr.bf16.mxu0 0
    %67 = vmatpush1.bf16.msra.mxu0 %v58
    %68 = vmatprep.subr.bf16.mxu0 0
    %69 = vmatpush1.bf16.msra.mxu0 %v59
    %70 = vmatprep.subr.bf16.mxu0 0
    %71 = vmatpush1.bf16.msra.mxu0 0
    %72 = vmatprep.subr.bf16.mxu0 0
    %73 = vmatpush1.bf16.msra.mxu0 0
    %74 = vmatprep.subr.bf16.mxu0 0
    %75 = vmatpush1.bf16.msra.mxu0 0
    %76 = vmatprep.subr.bf16.mxu0 0
    %77 = vmatpush1.bf16.msra.mxu0 0
    %78 = vmatprep.subr.bf16.mxu0 0
    %79 = vmatpush1.bf16.msra.mxu0 0
    %80 = vmatprep.subr.bf16.mxu0 0
    %81 = vmatpush1.bf16.msra.mxu0 0
    %82 = vmatprep.subr.bf16.mxu0 0
    %83 = vmatpush1.bf16.msra.mxu0 0
    %84 = vmatprep.subr.bf16.mxu0 0
    %85 = vmatpush1.bf16.msra.mxu0 0
    %86 = vmatprep.subr.bf16.mxu0 0
    %87 = vmatpush1.bf16.msra.mxu0 0
    %88 = vmatprep.subr.bf16.mxu0 0
    %89 = vmatpush1.bf16.msra.mxu0 0
    %90 = vmatprep.subr.bf16.mxu0 0
    %91 = vmatpush1.bf16.msra.mxu0 0
    %92 = vmatprep.subr.bf16.mxu0 0
    %93 = vmatpush1.bf16.msra.mxu0 0
    %94 = vmatprep.subr.bf16.mxu0 0
    %95 = vmatpush1.bf16.msra.mxu0 0
    %96 = vmatprep.subr.bf16.mxu0 0
    %97 = vmatpush1.bf16.msra.mxu0 0
    %98 = vmatprep.mubr.bf16.mxu0 0
    %99 = vmatmul.mubr.bf16.gmra.mrb[0].mxu0 %v64
    %v100 = vpop.f32.mrb[0].mxu0
    %v101 = vadd.f32 %v49, %v100
    %v102 = vpop.f32.mrb[0].mxu0
    %v103 = vpop.f32.mrb[0].mxu0
    %v104 = vpop.f32.mrb[0].mxu0
    %105 = vdwg.mxu0
    %v106 = vmax.f32 %v101, 0.0
    %v107 = vpack.c.bf16 %v106, %v106
    %v108 = vld [vmem:[#allocation4] sm:$0xff]
    %v109 = vld [vmem:[#allocation4 + $0x8] sm:$0xff]
    %v110 = vld [vmem:[#allocation4 + $0x10] sm:$0xff]
    %v111 = vld [vmem:[#allocation4 + $0x18] sm:$0xff]
    %v112 = vld [vmem:[#allocation4 + $0x20] sm:$0xff]
    %v113 = vld [vmem:[#allocation4 + $0x28] sm:$0xff]
    %v114 = vld [vmem:[#allocation4 + $0x30] sm:$0xff]
    %v115 = vld [vmem:[#allocation4 + $0x38] sm:$0xff]
    %v116 = vld [vmem:[#allocation4 + $0x40] sm:$0x11]
    %v117 = vunpack.c.l.bf16 %v116
    %v118 = vunpack.c.h.bf16 %v116
    %v119 = vlaneseq
    %v120 = vshrl.u32 %v119, 7
    %v121 = vsub.s32 0, %v120
    %v122 = vrot.slane %v117, %v121
    %v123 = vlaneseq
    %v124 = vshrl.u32 %v123, 7
    %v125 = vsub.s32 0, %v124
    %v126 = vrot.slane %v118, %v125
    %v135 = vunpack.c.l.b16 %v108
    %v136 = vunpack.c.h.b16 %v108
    %v137 = vunpack.c.l.b16 %v109
    %v138 = vunpack.c.h.b16 %v109
    %v139 = vunpack.c.l.b16 %v110
    %v140 = vunpack.c.h.b16 %v110
    %v141 = vunpack.c.l.b16 %v111
    %v142 = vunpack.c.h.b16 %v111
    %v143 = vunpack.c.l.b16 %v112
    %v144 = vunpack.c.h.b16 %v112
    %v145 = vunpack.c.l.b16 %v113
    %v146 = vunpack.c.h.b16 %v113
    %v147 = vunpack.c.l.b16 %v114
    %v148 = vunpack.c.h.b16 %v114
    %v149 = vunpack.c.l.b16 %v115
    %v150 = vunpack.c.h.b16 %v115
    %v151 = vpack.c.b16 %v137, %v135
    %v152 = vpack.c.b16 %v138, %v136
    %v153 = vpack.c.b16 %v141, %v139
    %v154 = vpack.c.b16 %v142, %v140
    %v155 = vpack.c.b16 %v145, %v143
    %v156 = vpack.c.b16 %v146, %v144
    %v157 = vpack.c.b16 %v149, %v147
    %v158 = vpack.c.b16 %v150, %v148
    %vm167 = vcmask 523264
    %v169 = vsel %vm167, %v107, 0
    %171 = vmatprep.subr.bf16.mxu0 %v152
    %172 = vmatpush1.bf16.msra.mxu0 %v151
    %173 = vmatprep.subr.bf16.mxu0 %v154
    %174 = vmatpush1.bf16.msra.mxu0 %v153
    %175 = vmatprep.subr.bf16.mxu0 %v156
    %176 = vmatpush1.bf16.msra.mxu0 %v155
    %177 = vmatprep.subr.bf16.mxu0 %v158
    %178 = vmatpush1.bf16.msra.mxu0 %v157
    %179 = vmatprep.subr.bf16.mxu0 0
    %180 = vmatpush1.bf16.msra.mxu0 0
    %181 = vmatprep.subr.bf16.mxu0 0
    %182 = vmatpush1.bf16.msra.mxu0 0
    %183 = vmatprep.subr.bf16.mxu0 0
    %184 = vmatpush1.bf16.msra.mxu0 0
    %185 = vmatprep.subr.bf16.mxu0 0
    %186 = vmatpush1.bf16.msra.mxu0 0
    %187 = vmatprep.subr.bf16.mxu0 0
    %188 = vmatpush1.bf16.msra.mxu0 0
    %189 = vmatprep.subr.bf16.mxu0 0
    %190 = vmatpush1.bf16.msra.mxu0 0
    %191 = vmatprep.subr.bf16.mxu0 0
    %192 = vmatpush1.bf16.msra.mxu0 0
    %193 = vmatprep.subr.bf16.mxu0 0
    %194 = vmatpush1.bf16.msra.mxu0 0
    %195 = vmatprep.subr.bf16.mxu0 0
    %196 = vmatpush1.bf16.msra.mxu0 0
    %197 = vmatprep.subr.bf16.mxu0 0
    %198 = vmatpush1.bf16.msra.mxu0 0
    %199 = vmatprep.subr.bf16.mxu0 0
    %200 = vmatpush1.bf16.msra.mxu0 0
    %201 = vmatprep.subr.bf16.mxu0 0
    %202 = vmatpush1.bf16.msra.mxu0 0
    %203 = vmatprep.mubr.bf16.mxu0 0
    %204 = vmatmul.mubr.bf16.gmra.mrb[0].mxu0 %v169
    %v205 = vpop.f32.mrb[0].mxu0
    %v206 = vadd.f32 %v122, %v205
    %v207 = vpop.f32.mrb[0].mxu0
    %v208 = vadd.f32 %v126, %v207
    %v209 = vpop.f32.mrb[0].mxu0
    %v210 = vpop.f32.mrb[0].mxu0
    %211 = vdwg.mxu0
    %v212 = vtanh.pop %v206
    %v213 = vtanh.pop %v208
    %v214 = vpack.c.bf16 %v212, %v212
    %v215 = vpack.c.bf16 %v213, %v213
    %v216 = vld [vmem:[#allocation4 + $0x80] sm:$0xf]
    %v217 = vld [vmem:[#allocation4 + $0x88] sm:$0xf]
    %v218 = vld [vmem:[#allocation4 + $0x90] sm:$0xf]
    %v219 = vld [vmem:[#allocation4 + $0x98] sm:$0xf]
    %v220 = vld [vmem:[#allocation4 + $0xa0] sm:$0xf]
    %v221 = vld [vmem:[#allocation4 + $0xa8] sm:$0xf]
    %v222 = vld [vmem:[#allocation4 + $0xb0] sm:$0xf]
    %v223 = vld [vmem:[#allocation4 + $0xb8] sm:$0xf]
    %v224 = vld [vmem:[#allocation4 + $0xc0] sm:$0xf]
    %v225 = vld [vmem:[#allocation4 + $0xc8] sm:$0xf]
    %v226 = vld [vmem:[#allocation4 + $0xd0] sm:$0xf]
    %v227 = vld [vmem:[#allocation4 + $0xd8] sm:$0xf]
    %v228 = vld [vmem:[#allocation4 + $0xe0] sm:$0xf]
    %v229 = vld [vmem:[#allocation4 + $0xe8] sm:$0xf]
    %v230 = vld [vmem:[#allocation4 + $0xf0] sm:$0xf]
    %v231 = vld [vmem:[#allocation4 + $0xf8] sm:$0xf]
    %v232 = vld [vmem:[#allocation4 + $0x100] sm:$0xf]
    %v233 = vld [vmem:[#allocation4 + $0x108] sm:$0xf]
    %v234 = vld [vmem:[#allocation4 + $0x110] sm:$0xf]
    %v235 = vld [vmem:[#allocation4 + $0x118] sm:$0xf]
    %v236 = vld [vmem:[#allocation4 + $0x120] sm:$0xf]
    %v237 = vld [vmem:[#allocation4 + $0x128] sm:$0xf]
    %v238 = vld [vmem:[#allocation4 + $0x130] sm:$0xf]
    %v239 = vld [vmem:[#allocation4 + $0x138] sm:$0xf]
    %v240 = vld [vmem:[#allocation4 + $0x140] sm:$0xf]
    %v241 = vld [vmem:[#allocation4 + $0x148] sm:$0xf]
    %v242 = vld [vmem:[#allocation4 + $0x150] sm:$0xf]
    %v243 = vld [vmem:[#allocation4 + $0x158] sm:$0xf]
    %v244 = vld [vmem:[#allocation4 + $0x160] sm:$0xf]
    %v245 = vld [vmem:[#allocation4 + $0x168] sm:$0xf]
    %v246 = vld [vmem:[#allocation4 + $0x170] sm:$0xf]
    %v247 = vld [vmem:[#allocation4 + $0x178] sm:$0xf]
    %v248 = vld [vmem:[#allocation4 + $0x180] sm:$0x1]
    %v249 = vunpack.c.l.bf16 %v248
    %v250 = vlaneseq
    %v251 = vshrl.u32 %v250, 7
    %v252 = vsub.s32 0, %v251
    %v253 = vrot.slane %v249, %v252
    %v286 = vunpack.c.l.b16 %v216
    %v287 = vunpack.c.l.b16 %v217
    %v288 = vunpack.c.l.b16 %v218
    %v289 = vunpack.c.l.b16 %v219
    %v290 = vunpack.c.l.b16 %v220
    %v291 = vunpack.c.l.b16 %v221
    %v292 = vunpack.c.l.b16 %v222
    %v293 = vunpack.c.l.b16 %v223
    %v294 = vunpack.c.l.b16 %v224
    %v295 = vunpack.c.l.b16 %v225
    %v296 = vunpack.c.l.b16 %v226
    %v297 = vunpack.c.l.b16 %v227
    %v298 = vunpack.c.l.b16 %v228
    %v299 = vunpack.c.l.b16 %v229
    %v300 = vunpack.c.l.b16 %v230
    %v301 = vunpack.c.l.b16 %v231
    %v302 = vunpack.c.l.b16 %v232
    %v303 = vunpack.c.l.b16 %v233
    %v304 = vunpack.c.l.b16 %v234
    %v305 = vunpack.c.l.b16 %v235
    %v306 = vunpack.c.l.b16 %v236
    %v307 = vunpack.c.l.b16 %v237
    %v308 = vunpack.c.l.b16 %v238
    %v309 = vunpack.c.l.b16 %v239
    %v310 = vunpack.c.l.b16 %v240
    %v311 = vunpack.c.l.b16 %v241
    %v312 = vunpack.c.l.b16 %v242
    %v313 = vunpack.c.l.b16 %v243
    %v314 = vunpack.c.l.b16 %v244
    %v315 = vunpack.c.l.b16 %v245
    %v316 = vunpack.c.l.b16 %v246
    %v317 = vunpack.c.l.b16 %v247
    %v318 = vpack.c.b16 %v287, %v286
    %v319 = vpack.c.b16 %v289, %v288
    %v320 = vpack.c.b16 %v291, %v290
    %v321 = vpack.c.b16 %v293, %v292
    %v322 = vpack.c.b16 %v295, %v294
    %v323 = vpack.c.b16 %v297, %v296
    %v324 = vpack.c.b16 %v299, %v298
    %v325 = vpack.c.b16 %v301, %v300
    %v326 = vpack.c.b16 %v303, %v302
    %v327 = vpack.c.b16 %v305, %v304
    %v328 = vpack.c.b16 %v307, %v306
    %v329 = vpack.c.b16 %v309, %v308
    %v330 = vpack.c.b16 %v311, %v310
    %v331 = vpack.c.b16 %v313, %v312
    %v332 = vpack.c.b16 %v315, %v314
    %v333 = vpack.c.b16 %v317, %v316
    %350 = vmatprep.subr.bf16.mxu0 0
    %351 = vmatpush1.bf16.msra.mxu0 %v318
    %352 = vmatprep.subr.bf16.mxu0 0
    %353 = vmatpush1.bf16.msra.mxu0 %v319
    %354 = vmatprep.subr.bf16.mxu0 0
    %355 = vmatpush1.bf16.msra.mxu0 %v320
    %356 = vmatprep.subr.bf16.mxu0 0
    %357 = vmatpush1.bf16.msra.mxu0 %v321
    %358 = vmatprep.subr.bf16.mxu0 0
    %359 = vmatpush1.bf16.msra.mxu0 %v322
    %360 = vmatprep.subr.bf16.mxu0 0
    %361 = vmatpush1.bf16.msra.mxu0 %v323
    %362 = vmatprep.subr.bf16.mxu0 0
    %363 = vmatpush1.bf16.msra.mxu0 %v324
    %364 = vmatprep.subr.bf16.mxu0 0
    %365 = vmatpush1.bf16.msra.mxu0 %v325
    %366 = vmatprep.subr.bf16.mxu0 0
    %367 = vmatpush1.bf16.msra.mxu0 %v326
    %368 = vmatprep.subr.bf16.mxu0 0
    %369 = vmatpush1.bf16.msra.mxu0 %v327
    %370 = vmatprep.subr.bf16.mxu0 0
    %371 = vmatpush1.bf16.msra.mxu0 %v328
    %372 = vmatprep.subr.bf16.mxu0 0
    %373 = vmatpush1.bf16.msra.mxu0 %v329
    %374 = vmatprep.subr.bf16.mxu0 0
    %375 = vmatpush1.bf16.msra.mxu0 %v330
    %376 = vmatprep.subr.bf16.mxu0 0
    %377 = vmatpush1.bf16.msra.mxu0 %v331
    %378 = vmatprep.subr.bf16.mxu0 0
    %379 = vmatpush1.bf16.msra.mxu0 %v332
    %380 = vmatprep.subr.bf16.mxu0 0
    %381 = vmatpush1.bf16.msra.mxu0 %v333
    %382 = vmatprep.mubr.bf16.mxu0 %v215
    %383 = vmatmul.mubr.bf16.gmra.mrb[0].mxu0 %v214
    %v384 = vpop.f32.mrb[0].mxu0
    %v385 = vadd.f32 %v253, %v384
    %v386 = vpop.f32.mrb[0].mxu0
    %v387 = vpop.f32.mrb[0].mxu0
    %v388 = vpop.f32.mrb[0].mxu0
    %389 = vdwg.mxu0
    %v390 = vmul.f32 %v385, 0.2
    %v391 = vmax.f32 %v385, %v390
    %v392 = vld [vmem:[#allocation4 + $0x190] sm:$0x1]
    %v393 = vunpack.c.l.bf16 %v392
    %v394 = vlaneseq
    %v395 = vshrl.u32 %v394, 7
    %v396 = vsub.s32 0, %v395
    %v397 = vrot.slane %v393, %v396
    %v398 = vmul.f32 %v391, %v397
    %v399 = vsel %vm167, %v398, 0.0
    %400 = vadd.xlane.f32.xlu0 %v399
    %v401 = vpop.xlane.xlu0 %400
    %v402 = vld [vmem:[#allocation4 + $0x1a0] sm:$0x1]
    %v403 = vunpack.c.l.bf16 %v402
    %v404 = vlaneseq
    %v405 = vshrl.u32 %v404, 7
    %v406 = vsub.s32 0, %v405
    %v407 = vrot.slane %v403, %v406
    %v408 = vadd.f32 %v401, %v407
    %vm409 = vcmask 7168
    %410 = vst.msk [vmem:[%s2] sm:$0xff] %vm409, %v408
    // Predicated region
    $region18: #{independent_latent_potential.1} parent=1 // pred_check
      _
    $region19: #{independent_latent_potential.1} parent=1 // pred_check_branch
      %412 = sbr.rel (0) target = $region21
    $region20: #{independent_latent_potential.1} parent=1 // pred_region
      _
    $region21: #{independent_latent_potential.1} parent=1 // pred_fallthru
      _
    // Predicated region
    $region22: #{independent_latent_potential.1} parent=1 // pred_check
      _
    $region23: #{independent_latent_potential.1} parent=1 // pred_check_branch
      %414 = sbr.rel (0) target = $region25
    $region24: #{independent_latent_potential.1} parent=1 // pred_region
      _
    $region25: #{independent_latent_potential.1} parent=1 // pred_fallthru
      _
    %415 = vsyncpa [#allocation3], 1
    %416 = vsyncpa [#allocation5], 1

</llo_original>
